<compile_context>
chip_gen: v7x
topology: tpu7x:2x2x1
jax: 0.10.0
libtpu: 0.0.40
codegen_flags: <defaults>
</compile_context>

<pallas_src>
import math

import jax
import jax.numpy as jnp
from jax.experimental import pallas as pl
from jax.experimental.pallas import tpu as pltpu

_LANE = 128      # vreg lane width (last dim)
_SUBLANE = 8     # vreg sublane count (second-to-last dim)


def _round_up(x, m):
    return ((x + m - 1) // m) * m


# ----------------------------------------------------------------------------
# Pallas kernel: fused MLP on one batch tile
# ----------------------------------------------------------------------------
def _make_mlp_kernel(n_layers):
    """x_tile @ W0 + b0 -> relu -> ... -> @ W_{L-1} + b_{L-1} (all lane-dense)."""

    def kernel(x_ref, *refs):
        # refs = (w0, b0, w1, b1, ..., out)
        out_ref = refs[-1]
        h = x_ref[...]  # f32 (TM, K0_pad)
        for i in range(n_layers):
            w = refs[2 * i][...]       # bf16 (K_i_pad, N_i_pad), VMEM-resident
            b = refs[2 * i + 1][...]   # f32  (1, N_i_pad)
            # MXU: bf16 x bf16 -> f32 accumulator.
            h = jnp.dot(h.astype(w.dtype), w, preferred_element_type=jnp.float32)
            # Elementwise work stays on the f32 accumulator (v5e-safe).
            h = h + b
            if i < n_layers - 1:
                h = jnp.maximum(h, 0.0)
        out_ref[...] = h  # lane-dense store (N_pad multiple of 128)

    return kernel


# ----------------------------------------------------------------------------
# Wrapper: batch tiling, padding, pallas_call
# ----------------------------------------------------------------------------
def mlp_forward_pallas(x, padded_weights, padded_biases, out_features, *, tm_max=512):
    """x: (B, in_features) f32.  padded_weights/biases: lane-padded params.
    Returns (B, out_features) f32 (padding sliced away)."""
    n_layers = len(padded_weights)
    batch, in_features = x.shape
    in_pad = padded_weights[0].shape[0]
    out_pad = padded_weights[-1].shape[1]
    assert in_features <= in_pad

    resident_bytes = sum(int(w.size) * w.dtype.itemsize for w in padded_weights)
    resident_bytes += sum(int(b.size) * b.dtype.itemsize for b in padded_biases)
    max_hidden_pad = max(w.shape[1] for w in padded_weights)

    # --- choose the batch tile TM (sublane-aligned, VMEM-budgeted) ----------
    vmem_budget = 40 * 1024 * 1024  # conservative: fits v7x's smaller VMEM
    tm = max(_SUBLANE, min(_round_up(tm_max, _SUBLANE), _round_up(batch, _SUBLANE)))
    while tm > _SUBLANE:
        # double-buffered x/out tiles + widest live f32 activation tile
        per_step = (2 * tm * in_pad * 4 + 2 * tm * out_pad * 4
                    + 2 * tm * max_hidden_pad * 4)
        if resident_bytes + per_step <= vmem_budget:
            break
        tm = max(_SUBLANE, _round_up(tm // 2, _SUBLANE))

    b_pad = _round_up(batch, tm)
    x_p = jnp.pad(x.astype(jnp.float32),
                  ((0, b_pad - batch), (0, in_pad - in_features)))

    grid = (b_pad // tm,)

    # --- specs: x/out tiled over batch, weights/biases resident -------------
    in_specs = [pl.BlockSpec((tm, in_pad), lambda i: (i, 0))]
    operands = [x_p]
    for w, b in zip(padded_weights, padded_biases):
        in_specs.append(pl.BlockSpec(w.shape, lambda i: (0, 0)))  # resident
        in_specs.append(pl.BlockSpec(b.shape, lambda i: (0, 0)))  # resident
        operands.append(w)
        operands.append(b)
    out_spec = pl.BlockSpec((tm, out_pad), lambda i: (i, 0))

    per_step = (2 * tm * in_pad * 4 + 2 * tm * out_pad * 4
                + 2 * tm * max_hidden_pad * 4)
    vmem_limit = min(64 * 1024 * 1024,
                     max(32 * 1024 * 1024, int(1.5 * (resident_bytes + per_step))))

    # Advisory cost estimate for XLA's scheduler around the custom call.
    flops = 0
    for w in padded_weights:
        flops += 2 * b_pad * w.shape[0] * w.shape[1]
    bytes_accessed = (x_p.size * 4 + b_pad * out_pad * 4 + resident_bytes)
    cost = pl.CostEstimate(flops=flops, transcendentals=0,
                           bytes_accessed=bytes_accessed)

    fn = pl.pallas_call(
        _make_mlp_kernel(n_layers),
        out_shape=jax.ShapeDtypeStruct((b_pad, out_pad), jnp.float32),
        grid=grid,
        in_specs=in_specs,
        out_specs=out_spec,
        compiler_params=pltpu.CompilerParams(
            dimension_semantics=("parallel",),   # batch tiles are independent
            vmem_limit_bytes=vmem_limit,
        ),
        cost_estimate=cost,
    )
    out = fn(*operands)
    if b_pad == batch and out_pad == out_features:
        return out
    return out[:batch, :out_features]


# ----------------------------------------------------------------------------
# SetClassifierLayer equivalent (parameter setup + forward wrapper)
# ----------------------------------------------------------------------------
class SetClassifierLayerPallas:
    _FINAL_LAYER_CFG = {
        "features": lambda s, f, c: dict(n_labels=s * f, n_classes=c),
        "pairwise_sim": lambda s, f, c: dict(n_labels=(s if s > 2 else 1) * f, n_classes=2),
        "triple_sim": lambda s, f, c: dict(n_labels=f, n_classes=2),
        "triple_dissim": lambda s, f, c: dict(n_labels=f, n_classes=2),
        "triple_valid_features": lambda s, f, c: dict(n_labels=f, n_classes=2),
        "triple_multiclass": lambda s, f, c: dict(n_labels=f, n_classes=c),
        "is_set": lambda s, f, c: dict(n_labels=1, n_classes=2),
    }

    def __init__(self, label_choice, embed_dim, seq_len=3, n_features=4,
                 n_feature_states=3, hidden_sizes=(), key=None,
                 weight_dtype=jnp.bfloat16):
        if label_choice not in self._FINAL_LAYER_CFG:
            raise ValueError(f"Invalid label_choice: {label_choice}")
        cfg = self._FINAL_LAYER_CFG[label_choice](seq_len, n_features, n_feature_states)
        self.label_choice = label_choice
        self.embed_dim = embed_dim
        self.seq_len = seq_len
        self.n_labels = cfg["n_labels"]
        self.n_classes = cfg["n_classes"]
        self.hidden_sizes = list(hidden_sizes)
        self.weight_dtype = weight_dtype

        input_size = self.seq_len * self.embed_dim
        if self.n_classes < 3:
            self.output_size = self.n_labels
            self._multiclass = False
        else:
            self.output_size = self.n_labels * self.n_classes
            self._multiclass = True

        # nn.Linear-style init, weights stored (in, out) so kernel does x @ W.
        if key is None:
            key = jax.random.PRNGKey(0)
        sizes = [input_size] + self.hidden_sizes + [self.output_size]
        self.weights, self.biases = [], []
        for i in range(len(sizes) - 1):
            fan_in, fan_out = sizes[i], sizes[i + 1]
            key, kw, kb = jax.random.split(key, 3)
            bound = 1.0 / math.sqrt(fan_in)
            self.weights.append(
                jax.random.uniform(kw, (fan_in, fan_out), jnp.float32, -bound, bound))
            self.biases.append(
                jax.random.uniform(kb, (1, fan_out), jnp.float32, -bound, bound))

        # Kernel-side params: bf16 weights, f32 biases, feature dims padded to
        # multiples of 128 (lane-dense matmuls + lane-dense final store).
        self._padded_weights, self._padded_biases = [], []
        for w, b in zip(self.weights, self.biases):
            in_p = _round_up(w.shape[0], _LANE)
            out_p = _round_up(w.shape[1], _LANE)
            wp = jnp.zeros((in_p, out_p), weight_dtype)
            wp = wp.at[: w.shape[0], : w.shape[1]].set(w.astype(weight_dtype))
            bp = jnp.zeros((1, out_p), jnp.float32).at[:, : b.shape[1]].set(b)
            self._padded_weights.append(wp)
            self._padded_biases.append(bp)

    def forward(self, x, tm_max=512):
        logits_flat = mlp_forward_pallas(
            x, self._padded_weights, self._padded_biases, self.output_size,
            tm_max=tm_max)
        if self._multiclass:
            # multiclass_classifier: .view(-1, n_labels, n_classes)
            return logits_flat.reshape(-1, self.n_labels, self.n_classes)
        # binary_classifier: .squeeze(-1) (only squeezes a size-1 last dim)
        return (jnp.squeeze(logits_flat, axis=-1)
                if logits_flat.shape[-1] == 1 else logits_flat)

    __call__ = forward


# ----------------------------------------------------------------------------
# Pure-JAX reference (same bf16-weight / f32-accumulate numerics)
# ----------------------------------------------------------------------------
def _reference_forward(model, x):
    h = x.astype(jnp.float32)
    n = len(model.weights)
    for i, (w, b) in enumerate(zip(model.weights, model.biases)):
        h = jnp.dot(h.astype(model.weight_dtype), w.astype(model.weight_dtype),
                    preferred_element_type=jnp.float32) + b
        if i < n - 1:
            h = jnp.maximum(h, 0.0)
    if model._multiclass:
        return h.reshape(-1, model.n_labels, model.n_classes)
    return jnp.squeeze(h, axis=-1) if h.shape[-1] == 1 else h


if __name__ == "__main__":
    key = jax.random.PRNGKey(0)
    key_x1, key_x2, key_p1, key_p2 = jax.random.split(key, 4)

    # --- Case 1: label_choice='features' (multiclass head), tiny batch -------
    # seq_len=3, n_features=4, n_feature_states=3 -> n_labels=12, n_classes=3,
    # output_size=36; embed_dim=32 -> input_size=96; one hidden layer of 64.
    embed_dim, seq_len, batch = 32, 3, 2
    model_mc = SetClassifierLayerPallas(
        label_choice="features", embed_dim=embed_dim, seq_len=seq_len,
        n_features=4, n_feature_states=3, hidden_sizes=[64], key=key_p1)
    x_mc = jax.random.normal(key_x1, (batch, seq_len * embed_dim), jnp.float32)

    logits_mc = jax.block_until_ready(model_mc(x_mc))
    ref_mc = _reference_forward(model_mc, x_mc)
    assert logits_mc.shape == (batch, model_mc.n_labels, model_mc.n_classes), logits_mc.shape
    assert jnp.allclose(logits_mc, ref_mc, atol=5e-3, rtol=5e-3), "multiclass mismatch"

    # --- Case 2: label_choice='is_set' (binary head), multi-step batch grid --
    # tm_max=8 forces TM=8 so the batch grid has 4 pipelined iterations.
    batch2 = 32
    model_bin = SetClassifierLayerPallas(
        label_choice="is_set", embed_dim=embed_dim, seq_len=seq_len,
        n_features=4, n_feature_states=3, hidden_sizes=[64], key=key_p2)
    x_bin = jax.random.normal(key_x2, (batch2, seq_len * embed_dim), jnp.float32)

    logits_bin = jax.block_until_ready(model_bin(x_bin, tm_max=8))
    ref_bin = _reference_forward(model_bin, x_bin)
    assert logits_bin.shape == (batch2,), logits_bin.shape
    assert jnp.allclose(logits_bin, ref_bin, atol=5e-3, rtol=5e-3), "binary mismatch"

    print("KERNEL_OK")
</pallas_src>

<mosaic_0001>
module attributes {stable_mosaic.version = 11 : i64} {
  func.func @kernel(%arg0: i32, %arg1: memref<8x128xf32, #tpu.memory_space<vmem>>, %arg2: memref<128x128xbf16, #tpu.memory_space<vmem>>, %arg3: memref<1x128xf32, #tpu.memory_space<vmem>>, %arg4: memref<128x128xbf16, #tpu.memory_space<vmem>>, %arg5: memref<1x128xf32, #tpu.memory_space<vmem>>, %arg6: memref<8x128xf32, #tpu.memory_space<vmem>>) attributes {dimension_semantics = [#tpu.dimension_semantics<parallel>], iteration_bounds = array<i64: 1>, scalar_prefetch = 0 : i64, scratch_operands = 0 : i64, tpu.core_type = #tpu.core_type<tc>, window_params = [{transform_indices = @transform_0, window_bounds = array<i64: 8, 128>}, {pipeline_mode = #tpu.pipeline_mode<synchronous>, transform_indices = @transform_1, window_bounds = array<i64: 128, 128>}, {pipeline_mode = #tpu.pipeline_mode<synchronous>, transform_indices = @transform_2, window_bounds = array<i64: 1, 128>}, {pipeline_mode = #tpu.pipeline_mode<synchronous>, transform_indices = @transform_3, window_bounds = array<i64: 128, 128>}, {pipeline_mode = #tpu.pipeline_mode<synchronous>, transform_indices = @transform_4, window_bounds = array<i64: 1, 128>}, {transform_indices = @transform_5, window_bounds = array<i64: 8, 128>}]} {
    %c0 = arith.constant 0 : index
    %c0_0 = arith.constant 0 : index
    %0 = vector.load %arg1[%c0, %c0_0] : memref<8x128xf32, #tpu.memory_space<vmem>>, vector<8x128xf32>
    %c0_1 = arith.constant 0 : index
    %c0_2 = arith.constant 0 : index
    %1 = vector.load %arg2[%c0_1, %c0_2] : memref<128x128xbf16, #tpu.memory_space<vmem>>, vector<128x128xbf16>
    %c0_3 = arith.constant 0 : index
    %c0_4 = arith.constant 0 : index
    %2 = vector.load %arg3[%c0_3, %c0_4] : memref<1x128xf32, #tpu.memory_space<vmem>>, vector<1x128xf32>
    %3 = arith.truncf %0 : vector<8x128xf32> to vector<8x128xbf16>
    %cst = arith.constant dense<0.000000e+00> : vector<8x128xf32>
    %4 = tpu.matmul %3, %1, %cst {dimension_numbers = #tpu.dot_dimension_numbers<[1], [0], [0], [1], [0, 0, 1, 1], [], []>} : vector<8x128xbf16>, vector<128x128xbf16>, vector<8x128xf32> -> vector<8x128xf32>
    %5 = vector.broadcast %2 : vector<1x128xf32> to vector<8x128xf32>
    %6 = arith.addf %4, %5 : vector<8x128xf32>
    %cst_5 = arith.constant 0.000000e+00 : f32
    %7 = vector.broadcast %cst_5 : f32 to vector<8x128xf32>
    %8 = arith.maximumf %6, %7 : vector<8x128xf32>
    %c0_6 = arith.constant 0 : index
    %c0_7 = arith.constant 0 : index
    %9 = vector.load %arg4[%c0_6, %c0_7] : memref<128x128xbf16, #tpu.memory_space<vmem>>, vector<128x128xbf16>
    %c0_8 = arith.constant 0 : index
    %c0_9 = arith.constant 0 : index
    %10 = vector.load %arg5[%c0_8, %c0_9] : memref<1x128xf32, #tpu.memory_space<vmem>>, vector<1x128xf32>
    %11 = arith.truncf %8 : vector<8x128xf32> to vector<8x128xbf16>
    %cst_10 = arith.constant dense<0.000000e+00> : vector<8x128xf32>
    %12 = tpu.matmul %11, %9, %cst_10 {dimension_numbers = #tpu.dot_dimension_numbers<[1], [0], [0], [1], [0, 0, 1, 1], [], []>} : vector<8x128xbf16>, vector<128x128xbf16>, vector<8x128xf32> -> vector<8x128xf32>
    %13 = vector.broadcast %10 : vector<1x128xf32> to vector<8x128xf32>
    %14 = arith.addf %12, %13 : vector<8x128xf32>
    %c0_11 = arith.constant 0 : index
    %c0_12 = arith.constant 0 : index
    %15 = vector.load %arg6[%c0_11, %c0_12] : memref<8x128xf32, #tpu.memory_space<vmem>>, vector<8x128xf32>
    tpu.vector_store %arg6[%c0_11, %c0_12], %14 {strides = array<i32>} : memref<8x128xf32, #tpu.memory_space<vmem>>, vector<8x128xf32>,
    return
  }
  func.func @transform_0(%arg0: i32) -> (i32, i32) {
    %c0_i32 = arith.constant 0 : i32
    %c0_i32_0 = arith.constant 0 : i32
    return %arg0, %c0_i32 : i32, i32
  }
  func.func @transform_1(%arg0: i32) -> (i32, i32) {
    %c0_i32 = arith.constant 0 : i32
    %c0_i32_0 = arith.constant 0 : i32
    %c0_i32_1 = arith.constant 0 : i32
    return %c0_i32, %c0_i32_0 : i32, i32
  }
  func.func @transform_2(%arg0: i32) -> (i32, i32) {
    %c0_i32 = arith.constant 0 : i32
    %c0_i32_0 = arith.constant 0 : i32
    %c0_i32_1 = arith.constant 0 : i32
    return %c0_i32, %c0_i32_0 : i32, i32
  }
  func.func @transform_3(%arg0: i32) -> (i32, i32) {
    %c0_i32 = arith.constant 0 : i32
    %c0_i32_0 = arith.constant 0 : i32
    %c0_i32_1 = arith.constant 0 : i32
    return %c0_i32, %c0_i32_0 : i32, i32
  }
  func.func @transform_4(%arg0: i32) -> (i32, i32) {
    %c0_i32 = arith.constant 0 : i32
    %c0_i32_0 = arith.constant 0 : i32
    %c0_i32_1 = arith.constant 0 : i32
    return %c0_i32, %c0_i32_0 : i32, i32
  }
  func.func @transform_5(%arg0: i32) -> (i32, i32) {
    %c0_i32 = arith.constant 0 : i32
    %c0_i32_0 = arith.constant 0 : i32
    return %arg0, %c0_i32 : i32, i32
  }
}

</mosaic_0001>

<llo_original>
// kernel: tpu_custom_call.1
$region0: #{tpu_custom_call.1}
  #allocation0 [shape = 'u32[]', space=smem, size = 0x4, offset = 0x4, fixed_abs, tag = 'smem constant byte address 0x4 - core index']
  #allocation1 [shape = 'u32[144,128]{1,0:T(1,128)}', space=vmem, size = 0x12000, scoped, tag = 'internal scratch']
  %s0 = inlined_call_operand.hbm [shape: f32[8,128], index: 0, kind: input, shape index: {}]
  %s1 = inlined_call_operand.hbm [shape: bf16[128,128], index: 1, kind: input, shape index: {}]
  %s2 = inlined_call_operand.vmem [shape: f32[1,128], index: 2, kind: input, shape index: {}]
  %s3 = inlined_call_operand.hbm [shape: bf16[128,128], index: 3, kind: input, shape index: {}]
  %s4 = inlined_call_operand.vmem [shape: f32[1,128], index: 4, kind: input, shape index: {}]
  %s5 = inlined_call_operand.hbm [shape: f32[8,128], index: 5, kind: output, shape index: {}]
  %s6 = sld [smem:[#allocation0]]
  $region42: #{tpu_custom_call.1} parent=0
    _
  %s8 = ssub.s32 1, %s6
  %s9 = scalar_select 0, %s8, %s6
  $region1: #{tpu_custom_call.1} parent=0
    #allocation2 [shape = 'u8[4096]{0}', space=vmem, size = 0x1000, scoped, tag = 'input window, operand 0, single buffered']
    #allocation3 [shape = 's32[1]{0}', space=sflag, size = 0x4, scoped, tag = 'scoped memory for tpu_custom_call.1']
    #allocation4 [shape = 's32[1]{0}', space=sflag, size = 0x4, scoped, tag = 'scoped memory for tpu_custom_call.1']
    #allocation5 [shape = 'u8[32768]{0}', space=vmem, size = 0x8000, scoped, tag = 'input window, operand 1, single buffered']
    #allocation6 [shape = 's32[1]{0}', space=sflag, size = 0x4, scoped, tag = 'scoped memory for tpu_custom_call.1']
    #allocation7 [shape = 'u8[32768]{0}', space=vmem, size = 0x8000, scoped, tag = 'input window, operand 3, single buffered']
    #allocation8 [shape = 'u8[4096]{0}', space=vmem, size = 0x1000, scoped, tag = 'output window, operand 0, single buffered']
    %10 = vsyncpa [#allocation3], 0
    %11 = vsyncpa [#allocation6], 0
    %12 = vsyncpa [#allocation4], 0
    // Predicated region
    $region2: #{tpu_custom_call.1} parent=1 // pred_check
      _
    $region3: #{tpu_custom_call.1} parent=1 // pred_check_branch
      %14 = sbr.rel (0) target = $region5
    $region4: #{tpu_custom_call.1} parent=1 // pred_region
      %s16 = ssub.s32 128, 128
      %17 = vsyncadd [#allocation3], %s16
      %s19 = sshll.u32 [#allocation2], 4
      %s20 = int_to_ptr.vmem [resolvable:$true] %s19
      %22 = dma.hbm_to_vmem [thread:$0]  %s0, 128, %s20, [#allocation3]
    $region5: #{tpu_custom_call.1} parent=1 // pred_fallthru
      _
    // Predicated region
    $region6: #{tpu_custom_call.1} parent=1 // pred_check
      _
    $region7: #{tpu_custom_call.1} parent=1 // pred_check_branch
      %24 = sbr.rel (0) target = $region9
    $region8: #{tpu_custom_call.1} parent=1 // pred_region
      %s26 = ssub.s32 1024, 1024
      %27 = vsyncadd [#allocation6], %s26
      %s28 = sshll.u32 [#allocation5], 4
      %s29 = int_to_ptr.vmem [resolvable:$true] %s28
      %34 = dma.hbm_to_vmem [thread:$0]  %s1, 1024, %s29, [#allocation6], 64, 64, 4
    $region9: #{tpu_custom_call.1} parent=1 // pred_fallthru
      _
    // Predicated region
    $region10: #{tpu_custom_call.1} parent=1 // pred_check
      _
    $region11: #{tpu_custom_call.1} parent=1 // pred_check_branch
      %36 = sbr.rel (0) target = $region13
    $region12: #{tpu_custom_call.1} parent=1 // pred_region
      _
    $region13: #{tpu_custom_call.1} parent=1 // pred_fallthru
      _
    // Predicated region
    $region14: #{tpu_custom_call.1} parent=1 // pred_check
      _
    $region15: #{tpu_custom_call.1} parent=1 // pred_check_branch
      %38 = sbr.rel (0) target = $region17
    $region16: #{tpu_custom_call.1} parent=1 // pred_region
      %s40 = ssub.s32 1024, 1024
      %41 = vsyncadd [#allocation6], %s40
      %s42 = sshll.u32 [#allocation7], 4
      %s43 = int_to_ptr.vmem [resolvable:$true] %s42
      %48 = dma.hbm_to_vmem [thread:$0]  %s3, 1024, %s43, [#allocation6], 64, 64, 4
    $region17: #{tpu_custom_call.1} parent=1 // pred_fallthru
      _
    // Predicated region
    $region18: #{tpu_custom_call.1} parent=1 // pred_check
      _
    $region19: #{tpu_custom_call.1} parent=1 // pred_check_branch
      %50 = sbr.rel (0) target = $region21
    $region20: #{tpu_custom_call.1} parent=1 // pred_region
      _
    $region21: #{tpu_custom_call.1} parent=1 // pred_fallthru
      _
    // Predicated region
    $region22: #{tpu_custom_call.1} parent=1 // pred_check
      _
    $region23: #{tpu_custom_call.1} parent=1 // pred_check_branch
      %52 = sbr.rel (0) target = $region25
    $region24: #{tpu_custom_call.1} parent=1 // pred_region
      %53 = dma.done [#allocation3], 128
    $region25: #{tpu_custom_call.1} parent=1 // pred_fallthru
      _
    // Predicated region
    $region26: #{tpu_custom_call.1} parent=1 // pred_check
      _
    $region27: #{tpu_custom_call.1} parent=1 // pred_check_branch
      %55 = sbr.rel (0) target = $region29
    $region28: #{tpu_custom_call.1} parent=1 // pred_region
      %56 = dma.done [#allocation6], 1024
    $region29: #{tpu_custom_call.1} parent=1 // pred_fallthru
      _
    // Predicated region
    $region30: #{tpu_custom_call.1} parent=1 // pred_check
      _
    $region31: #{tpu_custom_call.1} parent=1 // pred_check_branch
      %58 = sbr.rel (0) target = $region33
    $region32: #{tpu_custom_call.1} parent=1 // pred_region
      %59 = dma.done [#allocation6], 1024
    $region33: #{tpu_custom_call.1} parent=1 // pred_fallthru
      _
    %v61 = vld [vmem:[#allocation2] sm:$0xff]
    %v62 = vld [vmem:[#allocation5] sm:$0xf]
    %v63 = vld [vmem:[#allocation5 + $0x4] sm:$0xf]
    %v64 = vld [vmem:[#allocation5 + $0x8] sm:$0xf]
    %v65 = vld [vmem:[#allocation5 + $0xc] sm:$0xf]
    %v66 = vld [vmem:[#allocation5 + $0x10] sm:$0xf]
    %v67 = vld [vmem:[#allocation5 + $0x14] sm:$0xf]
    %v68 = vld [vmem:[#allocation5 + $0x18] sm:$0xf]
    %v69 = vld [vmem:[#allocation5 + $0x1c] sm:$0xf]
    %v70 = vld [vmem:[#allocation5 + $0x20] sm:$0xf]
    %v71 = vld [vmem:[#allocation5 + $0x24] sm:$0xf]
    %v72 = vld [vmem:[#allocation5 + $0x28] sm:$0xf]
    %v73 = vld [vmem:[#allocation5 + $0x2c] sm:$0xf]
    %v74 = vld [vmem:[#allocation5 + $0x30] sm:$0xf]
    %v75 = vld [vmem:[#allocation5 + $0x34] sm:$0xf]
    %v76 = vld [vmem:[#allocation5 + $0x38] sm:$0xf]
    %v77 = vld [vmem:[#allocation5 + $0x3c] sm:$0xf]
    %v78 = vld [vmem:[%s2] sm:$0x1]
    %v79 = vpack.c.bf16 %v61, %v61
    %v81 = vlaneseq
    %v82 = vshrl.u32 %v81, 7
    %v83 = vsub.s32 0, %v82
    %v84 = vrot.slane %v78, %v83
    %v102 = vunpack.c.l.b16 %v62
    %v103 = vunpack.c.l.b16 %v63
    %v104 = vunpack.c.l.b16 %v64
    %v105 = vunpack.c.l.b16 %v65
    %v106 = vunpack.c.l.b16 %v66
    %v107 = vunpack.c.l.b16 %v67
    %v108 = vunpack.c.l.b16 %v68
    %v109 = vunpack.c.l.b16 %v69
    %v110 = vunpack.c.l.b16 %v70
    %v111 = vunpack.c.l.b16 %v71
    %v112 = vunpack.c.l.b16 %v72
    %v113 = vunpack.c.l.b16 %v73
    %v114 = vunpack.c.l.b16 %v74
    %v115 = vunpack.c.l.b16 %v75
    %v116 = vunpack.c.l.b16 %v76
    %v117 = vunpack.c.l.b16 %v77
    %v118 = vpack.c.b16 %v103, %v102
    %v119 = vpack.c.b16 %v105, %v104
    %v120 = vpack.c.b16 %v107, %v106
    %v121 = vpack.c.b16 %v109, %v108
    %v122 = vpack.c.b16 %v111, %v110
    %v123 = vpack.c.b16 %v113, %v112
    %v124 = vpack.c.b16 %v115, %v114
    %v125 = vpack.c.b16 %v117, %v116
    %134 = vmatprep.subr.bf16.mxu0 0
    %135 = vmatpush1.bf16.msra.mxu0 %v118
    %136 = vmatprep.subr.bf16.mxu0 0
    %137 = vmatpush1.bf16.msra.mxu0 %v119
    %138 = vmatprep.subr.bf16.mxu0 0
    %139 = vmatpush1.bf16.msra.mxu0 %v120
    %140 = vmatprep.subr.bf16.mxu0 0
    %141 = vmatpush1.bf16.msra.mxu0 %v121
    %142 = vmatprep.subr.bf16.mxu0 0
    %143 = vmatpush1.bf16.msra.mxu0 %v122
    %144 = vmatprep.subr.bf16.mxu0 0
    %145 = vmatpush1.bf16.msra.mxu0 %v123
    %146 = vmatprep.subr.bf16.mxu0 0
    %147 = vmatpush1.bf16.msra.mxu0 %v124
    %148 = vmatprep.subr.bf16.mxu0 0
    %149 = vmatpush1.bf16.msra.mxu0 %v125
    %150 = vmatprep.subr.bf16.mxu0 0
    %151 = vmatpush1.bf16.msra.mxu0 0
    %152 = vmatprep.subr.bf16.mxu0 0
    %153 = vmatpush1.bf16.msra.mxu0 0
    %154 = vmatprep.subr.bf16.mxu0 0
    %155 = vmatpush1.bf16.msra.mxu0 0
    %156 = vmatprep.subr.bf16.mxu0 0
    %157 = vmatpush1.bf16.msra.mxu0 0
    %158 = vmatprep.subr.bf16.mxu0 0
    %159 = vmatpush1.bf16.msra.mxu0 0
    %160 = vmatprep.subr.bf16.mxu0 0
    %161 = vmatpush1.bf16.msra.mxu0 0
    %162 = vmatprep.subr.bf16.mxu0 0
    %163 = vmatpush1.bf16.msra.mxu0 0
    %164 = vmatprep.subr.bf16.mxu0 0
    %165 = vmatpush1.bf16.msra.mxu0 0
    %166 = vmatprep.mubr.bf16.mxu0 0
    %167 = vmatmul.mubr.bf16.gmra.mrb[0].mxu0 %v79
    %v168 = vpop.f32.mrb[0].mxu0
    %v169 = vadd.f32 %v84, %v168
    %v170 = vpop.f32.mrb[0].mxu0
    %v171 = vpop.f32.mrb[0].mxu0
    %v172 = vpop.f32.mrb[0].mxu0
    %173 = vdwg.mxu0
    %v174 = vmax.f32 %v169, 0.0
    %v175 = vld [vmem:[#allocation7] sm:$0xf]
    %v176 = vld [vmem:[#allocation7 + $0x4] sm:$0xf]
    %v177 = vld [vmem:[#allocation7 + $0x8] sm:$0xf]
    %v178 = vld [vmem:[#allocation7 + $0xc] sm:$0xf]
    %v179 = vld [vmem:[#allocation7 + $0x10] sm:$0xf]
    %v180 = vld [vmem:[#allocation7 + $0x14] sm:$0xf]
    %v181 = vld [vmem:[#allocation7 + $0x18] sm:$0xf]
    %v182 = vld [vmem:[#allocation7 + $0x1c] sm:$0xf]
    %v183 = vld [vmem:[#allocation7 + $0x20] sm:$0xf]
    %v184 = vld [vmem:[#allocation7 + $0x24] sm:$0xf]
    %v185 = vld [vmem:[#allocation7 + $0x28] sm:$0xf]
    %v186 = vld [vmem:[#allocation7 + $0x2c] sm:$0xf]
    %v187 = vld [vmem:[#allocation7 + $0x30] sm:$0xf]
    %v188 = vld [vmem:[#allocation7 + $0x34] sm:$0xf]
    %v189 = vld [vmem:[#allocation7 + $0x38] sm:$0xf]
    %v190 = vld [vmem:[#allocation7 + $0x3c] sm:$0xf]
    %v191 = vld [vmem:[%s4] sm:$0x1]
    %v192 = vpack.c.bf16 %v174, %v174
    %v194 = vlaneseq
    %v195 = vshrl.u32 %v194, 7
    %v196 = vsub.s32 0, %v195
    %v197 = vrot.slane %v191, %v196
    %v215 = vunpack.c.l.b16 %v175
    %v216 = vunpack.c.l.b16 %v176
    %v217 = vunpack.c.l.b16 %v177
    %v218 = vunpack.c.l.b16 %v178
    %v219 = vunpack.c.l.b16 %v179
    %v220 = vunpack.c.l.b16 %v180
    %v221 = vunpack.c.l.b16 %v181
    %v222 = vunpack.c.l.b16 %v182
    %v223 = vunpack.c.l.b16 %v183
    %v224 = vunpack.c.l.b16 %v184
    %v225 = vunpack.c.l.b16 %v185
    %v226 = vunpack.c.l.b16 %v186
    %v227 = vunpack.c.l.b16 %v187
    %v228 = vunpack.c.l.b16 %v188
    %v229 = vunpack.c.l.b16 %v189
    %v230 = vunpack.c.l.b16 %v190
    %v231 = vpack.c.b16 %v216, %v215
    %v232 = vpack.c.b16 %v218, %v217
    %v233 = vpack.c.b16 %v220, %v219
    %v234 = vpack.c.b16 %v222, %v221
    %v235 = vpack.c.b16 %v224, %v223
    %v236 = vpack.c.b16 %v226, %v225
    %v237 = vpack.c.b16 %v228, %v227
    %v238 = vpack.c.b16 %v230, %v229
    %247 = vmatprep.subr.bf16.mxu0 0
    %248 = vmatpush1.bf16.msra.mxu0 %v231
    %249 = vmatprep.subr.bf16.mxu0 0
    %250 = vmatpush1.bf16.msra.mxu0 %v232
    %251 = vmatprep.subr.bf16.mxu0 0
    %252 = vmatpush1.bf16.msra.mxu0 %v233
    %253 = vmatprep.subr.bf16.mxu0 0
    %254 = vmatpush1.bf16.msra.mxu0 %v234
    %255 = vmatprep.subr.bf16.mxu0 0
    %256 = vmatpush1.bf16.msra.mxu0 %v235
    %257 = vmatprep.subr.bf16.mxu0 0
    %258 = vmatpush1.bf16.msra.mxu0 %v236
    %259 = vmatprep.subr.bf16.mxu0 0
    %260 = vmatpush1.bf16.msra.mxu0 %v237
    %261 = vmatprep.subr.bf16.mxu0 0
    %262 = vmatpush1.bf16.msra.mxu0 %v238
    %263 = vmatprep.subr.bf16.mxu0 0
    %264 = vmatpush1.bf16.msra.mxu0 0
    %265 = vmatprep.subr.bf16.mxu0 0
    %266 = vmatpush1.bf16.msra.mxu0 0
    %267 = vmatprep.subr.bf16.mxu0 0
    %268 = vmatpush1.bf16.msra.mxu0 0
    %269 = vmatprep.subr.bf16.mxu0 0
    %270 = vmatpush1.bf16.msra.mxu0 0
    %271 = vmatprep.subr.bf16.mxu0 0
    %272 = vmatpush1.bf16.msra.mxu0 0
    %273 = vmatprep.subr.bf16.mxu0 0
    %274 = vmatpush1.bf16.msra.mxu0 0
    %275 = vmatprep.subr.bf16.mxu0 0
    %276 = vmatpush1.bf16.msra.mxu0 0
    %277 = vmatprep.subr.bf16.mxu0 0
    %278 = vmatpush1.bf16.msra.mxu0 0
    %279 = vmatprep.mubr.bf16.mxu0 0
    %280 = vmatmul.mubr.bf16.gmra.mrb[0].mxu0 %v192
    %v281 = vpop.f32.mrb[0].mxu0
    %v282 = vadd.f32 %v197, %v281
    %v283 = vpop.f32.mrb[0].mxu0
    %v284 = vpop.f32.mrb[0].mxu0
    %v285 = vpop.f32.mrb[0].mxu0
    %286 = vdwg.mxu0
    %287 = vst [vmem:[#allocation8] sm:$0xff] %v282
    // Predicated region
    $region34: #{tpu_custom_call.1} parent=1 // pred_check
      _
    $region35: #{tpu_custom_call.1} parent=1 // pred_check_branch
      %289 = sbr.rel (0) target = $region37
    $region36: #{tpu_custom_call.1} parent=1 // pred_region
      %s291 = ssub.s32 128, 128
      %292 = vsyncadd [#allocation4], %s291
      %s294 = sshll.u32 [#allocation8], 4
      %s295 = int_to_ptr.vmem [resolvable:$true] %s294
      %297 = dma.vmem_to_hbm [thread:$0]  %s295, 128, %s5, [#allocation4]
    $region37: #{tpu_custom_call.1} parent=1 // pred_fallthru
      _
    // Predicated region
    $region38: #{tpu_custom_call.1} parent=1 // pred_check
      _
    $region39: #{tpu_custom_call.1} parent=1 // pred_check_branch
      %299 = sbr.rel (0) target = $region41
    $region40: #{tpu_custom_call.1} parent=1 // pred_region
      %300 = dma.done [#allocation4], 128
    $region41: #{tpu_custom_call.1} parent=1 // pred_fallthru
      _
    %301 = vsyncpa [#allocation3], 1
    %302 = vsyncpa [#allocation6], 1
    %303 = vsyncpa [#allocation4], 1

</llo_original>
